<compile_context>
chip_gen: v7x
topology: tpu7x:2x2x1
jax: 0.10.0
libtpu: 0.0.40
codegen_flags: <defaults>
</compile_context>

<pallas_src>
import jax
import jax.numpy as jnp
from jax.experimental import pallas as pl
from jax.experimental.pallas import tpu as pltpu

# ---- config (stands in for the missing `config` module in critic.py) --------
HIDDEN1_UNITS = 64
HIDDEN2_UNITS = 32


def _round_up(x, m):
    return (x + m - 1) // m * m


# ---------------------------- Pallas kernel ----------------------------------
def _critic_kernel(x_ref, w1_ref, b1_ref, w2_ref, b2_ref, w3_ref, b3_ref, out_ref):
    # fc1 + ReLU.  Matmul operands may be bf16; accumulation (preferred_element_type),
    # bias add and ReLU are f32 on the VPU.
    h1 = jnp.dot(x_ref[...], w1_ref[...],
                 preferred_element_type=jnp.float32) + b1_ref[...]
    h1 = jnp.maximum(h1, 0.0)

    # fc2 + ReLU
    h2 = jnp.dot(h1.astype(w2_ref.dtype), w2_ref[...],
                 preferred_element_type=jnp.float32) + b2_ref[...]
    h2 = jnp.maximum(h2, 0.0)

    # fc3 (out_features == 1): contract h2 (TB, H2) with the (1, H2) weight row so
    # the result lands lane-major as a (1, TB) row -> lane-dense output stores.
    q = jax.lax.dot_general(
        w3_ref[...], h2.astype(w3_ref.dtype),
        dimension_numbers=(((1,), (1,)), ((), ())),
        preferred_element_type=jnp.float32)
    out_ref[...] = (q + b3_ref[...]).astype(out_ref.dtype)


def critic_forward(state, action, params, *, matmul_dtype=jnp.float32,
                   max_batch_tile=512):
    """state: (B, state_dim) f32, action: (B, action_dim) f32 -> (B, 1) f32."""
    w1, b1, w2, b2, w3_row, b3 = params
    d_in, h1u = w1.shape
    h2u = w2.shape[1]
    B = state.shape[0]

    # Fuse the concat in the wrapper (cheap XLA op) so the kernel does one fc1 matmul.
    x = jnp.concatenate([state, action], axis=1).astype(matmul_dtype)

    tb = min(max_batch_tile, _round_up(max(B, 1), 128))   # batch tile, multiple of 128
    b_pad = _round_up(B, tb)
    if b_pad != B:
        x = jnp.pad(x, ((0, b_pad - B), (0, 0)))
    grid = (b_pad // tb,)

    w1c = w1.astype(matmul_dtype)
    w2c = w2.astype(matmul_dtype)
    w3c = w3_row.astype(matmul_dtype)

    def _resident(arr):
        # Full block + constant index map -> weights/biases stay VMEM-resident,
        # DMA'd only once across the whole batch grid.
        return pl.BlockSpec(arr.shape, lambda i: (0, 0))

    flops = 2 * b_pad * (d_in * h1u + h1u * h2u + h2u)
    bytes_accessed = (
        x.size * x.dtype.itemsize
        + sum(a.size * a.dtype.itemsize for a in (w1c, b1, w2c, b2, w3c, b3))
        + b_pad * 4)

    out = pl.pallas_call(
        _critic_kernel,
        out_shape=jax.ShapeDtypeStruct((1, b_pad), jnp.float32),
        grid=grid,
        in_specs=[
            pl.BlockSpec((tb, d_in), lambda i: (i, 0)),   # pipelined activation tiles
            _resident(w1c), _resident(b1),
            _resident(w2c), _resident(b2),
            _resident(w3c), _resident(b3),
        ],
        out_specs=pl.BlockSpec((1, tb), lambda i: (0, i)),  # lane-dense (1, TB) rows
        compiler_params=pltpu.CompilerParams(dimension_semantics=("parallel",)),
        cost_estimate=pl.CostEstimate(
            flops=flops, transcendentals=0, bytes_accessed=bytes_accessed),
    )(x, w1c, b1, w2c, b2, w3c, b3)

    # (1, B_pad) lane-major -> (B, 1), dropping batch padding.
    return out.reshape(b_pad, 1)[:B]


# ------------------------- deterministic param init --------------------------
def init_params(key, state_dim, action_dim):
    """PyTorch nn.Linear default init: U(-1/sqrt(fan_in), 1/sqrt(fan_in))."""
    def linear(key, fan_in, fan_out):
        kw, kb = jax.random.split(key)
        lim = 1.0 / jnp.sqrt(jnp.float32(fan_in))
        w = jax.random.uniform(kw, (fan_in, fan_out), jnp.float32, -lim, lim)
        b = jax.random.uniform(kb, (1, fan_out), jnp.float32, -lim, lim)
        return w, b

    k1, k2, k3 = jax.random.split(key, 3)
    w1, b1 = linear(k1, state_dim + action_dim, HIDDEN1_UNITS)
    w2, b2 = linear(k2, HIDDEN1_UNITS, HIDDEN2_UNITS)
    w3, b3 = linear(k3, HIDDEN2_UNITS, 1)
    # fc3 weight stored transposed as a (1, HIDDEN2_UNITS) row; b3 is (1, 1).
    return (w1, b1, w2, b2, w3.T, b3)


def critic_reference(state, action, params):
    """Pure-JAX reference of the PyTorch forward for correctness checking."""
    w1, b1, w2, b2, w3_row, b3 = params
    x = jnp.concatenate([state, action], axis=1)
    h1 = jax.nn.relu(x @ w1 + b1)
    h2 = jax.nn.relu(h1 @ w2 + b2)
    return h2 @ w3_row.T + b3


# ----------------------------------- main ------------------------------------
if __name__ == "__main__":
    state_dim, action_dim, batch = 24, 4, 8

    key = jax.random.PRNGKey(0)
    kp, ks, ka = jax.random.split(key, 3)

    params = init_params(kp, state_dim, action_dim)
    state = jax.random.normal(ks, (batch, state_dim), jnp.float32)
    action = jax.random.normal(ka, (batch, action_dim), jnp.float32)

    q_ref = critic_reference(state, action, params)

    # Exact f32 path.
    q32 = critic_forward(state, action, params, matmul_dtype=jnp.float32)
    jax.block_until_ready(q32)
    assert q32.shape == (batch, 1)
    assert jnp.allclose(q32, q_ref, atol=1e-5, rtol=1e-5)

    # bf16 matmul operands (MXU-native on v6e/v7x), f32 accumulation/bias/ReLU.
    qbf = critic_forward(state, action, params, matmul_dtype=jnp.bfloat16)
    jax.block_until_ready(qbf)
    assert qbf.shape == (batch, 1)
    assert jnp.allclose(qbf, q_ref, atol=5e-2, rtol=5e-2)

    print("KERNEL_OK")
</pallas_src>

<mosaic_0001>
module attributes {stable_mosaic.version = 11 : i64} {
  func.func @_critic_kernel(%arg0: i32, %arg1: memref<128x28xf32, #tpu.memory_space<vmem>>, %arg2: memref<28x64xf32, #tpu.memory_space<vmem>>, %arg3: memref<1x64xf32, #tpu.memory_space<vmem>>, %arg4: memref<64x32xf32, #tpu.memory_space<vmem>>, %arg5: memref<1x32xf32, #tpu.memory_space<vmem>>, %arg6: memref<1x32xf32, #tpu.memory_space<vmem>>, %arg7: memref<1x1xf32, #tpu.memory_space<vmem>>, %arg8: memref<1x128xf32, #tpu.memory_space<vmem>>) attributes {dimension_semantics = [#tpu.dimension_semantics<parallel>], iteration_bounds = array<i64: 1>, scalar_prefetch = 0 : i64, scratch_operands = 0 : i64, tpu.core_type = #tpu.core_type<tc>, window_params = [{transform_indices = @transform_0, window_bounds = array<i64: 128, 28>}, {pipeline_mode = #tpu.pipeline_mode<synchronous>, transform_indices = @transform_1, window_bounds = array<i64: 28, 64>}, {pipeline_mode = #tpu.pipeline_mode<synchronous>, transform_indices = @transform_2, window_bounds = array<i64: 1, 64>}, {pipeline_mode = #tpu.pipeline_mode<synchronous>, transform_indices = @transform_3, window_bounds = array<i64: 64, 32>}, {pipeline_mode = #tpu.pipeline_mode<synchronous>, transform_indices = @transform_4, window_bounds = array<i64: 1, 32>}, {pipeline_mode = #tpu.pipeline_mode<synchronous>, transform_indices = @transform_5, window_bounds = array<i64: 1, 32>}, {pipeline_mode = #tpu.pipeline_mode<synchronous>, transform_indices = @transform_6, window_bounds = array<i64: 1, 1>}, {transform_indices = @transform_7, window_bounds = array<i64: 1, 128>}]} {
    %c0 = arith.constant 0 : index
    %c0_0 = arith.constant 0 : index
    %0 = vector.load %arg1[%c0, %c0_0] : memref<128x28xf32, #tpu.memory_space<vmem>>, vector<128x28xf32>
    %c0_1 = arith.constant 0 : index
    %c0_2 = arith.constant 0 : index
    %1 = vector.load %arg2[%c0_1, %c0_2] : memref<28x64xf32, #tpu.memory_space<vmem>>, vector<28x64xf32>
    %cst = arith.constant dense<0.000000e+00> : vector<128x64xf32>
    %2 = tpu.matmul %0, %1, %cst {dimension_numbers = #tpu.dot_dimension_numbers<[1], [0], [0], [1], [0, 0, 1, 1], [], []>} : vector<128x28xf32>, vector<28x64xf32>, vector<128x64xf32> -> vector<128x64xf32>
    %c0_3 = arith.constant 0 : index
    %c0_4 = arith.constant 0 : index
    %3 = vector.load %arg3[%c0_3, %c0_4] : memref<1x64xf32, #tpu.memory_space<vmem>>, vector<1x64xf32>
    %4 = vector.broadcast %3 : vector<1x64xf32> to vector<128x64xf32>
    %5 = arith.addf %2, %4 : vector<128x64xf32>
    %cst_5 = arith.constant 0.000000e+00 : f32
    %6 = vector.broadcast %cst_5 : f32 to vector<128x64xf32>
    %7 = arith.maximumf %5, %6 : vector<128x64xf32>
    %c0_6 = arith.constant 0 : index
    %c0_7 = arith.constant 0 : index
    %8 = vector.load %arg4[%c0_6, %c0_7] : memref<64x32xf32, #tpu.memory_space<vmem>>, vector<64x32xf32>
    %cst_8 = arith.constant dense<0.000000e+00> : vector<128x32xf32>
    %9 = tpu.matmul %7, %8, %cst_8 {dimension_numbers = #tpu.dot_dimension_numbers<[1], [0], [0], [1], [0, 0, 1, 1], [], []>} : vector<128x64xf32>, vector<64x32xf32>, vector<128x32xf32> -> vector<128x32xf32>
    %c0_9 = arith.constant 0 : index
    %c0_10 = arith.constant 0 : index
    %10 = vector.load %arg5[%c0_9, %c0_10] : memref<1x32xf32, #tpu.memory_space<vmem>>, vector<1x32xf32>
    %11 = vector.broadcast %10 : vector<1x32xf32> to vector<128x32xf32>
    %12 = arith.addf %9, %11 : vector<128x32xf32>
    %cst_11 = arith.constant 0.000000e+00 : f32
    %13 = vector.broadcast %cst_11 : f32 to vector<128x32xf32>
    %14 = arith.maximumf %12, %13 : vector<128x32xf32>
    %c0_12 = arith.constant 0 : index
    %c0_13 = arith.constant 0 : index
    %15 = vector.load %arg6[%c0_12, %c0_13] : memref<1x32xf32, #tpu.memory_space<vmem>>, vector<1x32xf32>
    %cst_14 = arith.constant dense<0.000000e+00> : vector<1x128xf32>
    %16 = tpu.matmul %15, %14, %cst_14 {dimension_numbers = #tpu.dot_dimension_numbers<[1], [1], [0], [0], [0, 0, 1, 0], [], []>} : vector<1x32xf32>, vector<128x32xf32>, vector<1x128xf32> -> vector<1x128xf32>
    %c0_15 = arith.constant 0 : index
    %c0_16 = arith.constant 0 : index
    %17 = vector.load %arg7[%c0_15, %c0_16] : memref<1x1xf32, #tpu.memory_space<vmem>>, vector<1x1xf32>
    %18 = vector.broadcast %17 : vector<1x1xf32> to vector<1x128xf32>
    %19 = arith.addf %16, %18 : vector<1x128xf32>
    %c0_17 = arith.constant 0 : index
    %c0_18 = arith.constant 0 : index
    %20 = vector.load %arg8[%c0_17, %c0_18] : memref<1x128xf32, #tpu.memory_space<vmem>>, vector<1x128xf32>
    tpu.vector_store %arg8[%c0_17, %c0_18], %19 {strides = array<i32>} : memref<1x128xf32, #tpu.memory_space<vmem>>, vector<1x128xf32>,
    return
  }
  func.func @transform_0(%arg0: i32) -> (i32, i32) {
    %c0_i32 = arith.constant 0 : i32
    %c0_i32_0 = arith.constant 0 : i32
    return %arg0, %c0_i32 : i32, i32
  }
  func.func @transform_1(%arg0: i32) -> (i32, i32) {
    %c0_i32 = arith.constant 0 : i32
    %c0_i32_0 = arith.constant 0 : i32
    %c0_i32_1 = arith.constant 0 : i32
    return %c0_i32, %c0_i32_0 : i32, i32
  }
  func.func @transform_2(%arg0: i32) -> (i32, i32) {
    %c0_i32 = arith.constant 0 : i32
    %c0_i32_0 = arith.constant 0 : i32
    %c0_i32_1 = arith.constant 0 : i32
    return %c0_i32, %c0_i32_0 : i32, i32
  }
  func.func @transform_3(%arg0: i32) -> (i32, i32) {
    %c0_i32 = arith.constant 0 : i32
    %c0_i32_0 = arith.constant 0 : i32
    %c0_i32_1 = arith.constant 0 : i32
    return %c0_i32, %c0_i32_0 : i32, i32
  }
  func.func @transform_4(%arg0: i32) -> (i32, i32) {
    %c0_i32 = arith.constant 0 : i32
    %c0_i32_0 = arith.constant 0 : i32
    %c0_i32_1 = arith.constant 0 : i32
    return %c0_i32, %c0_i32_0 : i32, i32
  }
  func.func @transform_5(%arg0: i32) -> (i32, i32) {
    %c0_i32 = arith.constant 0 : i32
    %c0_i32_0 = arith.constant 0 : i32
    %c0_i32_1 = arith.constant 0 : i32
    return %c0_i32, %c0_i32_0 : i32, i32
  }
  func.func @transform_6(%arg0: i32) -> (i32, i32) {
    %c0_i32 = arith.constant 0 : i32
    %c0_i32_0 = arith.constant 0 : i32
    %c0_i32_1 = arith.constant 0 : i32
    return %c0_i32, %c0_i32_0 : i32, i32
  }
  func.func @transform_7(%arg0: i32) -> (i32, i32) {
    %c0_i32 = arith.constant 0 : i32
    %c0_i32_0 = arith.constant 0 : i32
    return %c0_i32, %arg0 : i32, i32
  }
}

</mosaic_0001>

<llo_original>
// kernel: tpu_custom_call.1
$region0: #{tpu_custom_call.1}
  #allocation0 [shape = 'u32[]', space=smem, size = 0x4, offset = 0x4, fixed_abs, tag = 'smem constant byte address 0x4 - core index']
  #allocation1 [shape = 'u32[144,128]{1,0:T(1,128)}', space=vmem, size = 0x12000, scoped, tag = 'internal scratch']
  #allocation2 [shape = 'f32[1,1]{1,0:T(1,128)S(1)}', space=vmem, size = 0x200, scoped, tag = 'scoped memory for tpu_custom_call.1']
  %s0 = inlined_call_operand.vmem [shape: f32[128,28], index: 0, kind: input, shape index: {}]
  %s1 = inlined_call_operand.vmem [shape: f32[28,64], index: 1, kind: input, shape index: {}]
  %s2 = inlined_call_operand.vmem [shape: f32[1,64], index: 2, kind: input, shape index: {}]
  %s3 = inlined_call_operand.vmem [shape: f32[64,32], index: 3, kind: input, shape index: {}]
  %s4 = inlined_call_operand.vmem [shape: f32[1,32], index: 4, kind: input, shape index: {}]
  %s5 = inlined_call_operand.vmem [shape: f32[1,32], index: 5, kind: input, shape index: {}]
  %s6 = inlined_call_operand.<no memory space> [shape: f32[1,1], index: 6, kind: input, shape index: {}]
  %s7 = inlined_call_operand.hbm [shape: f32[1,128], index: 7, kind: output, shape index: {}]
  %s8 = sld [smem:[#allocation0]]
  $region38: #{tpu_custom_call.1} parent=0
    _
  %s10 = ssub.s32 1, %s8
  %s11 = scalar_select 0, %s10, %s8
  %v12 = vstv %s6
  %13 = vst [vmem:[#allocation2] sm:$0x1] %v12
  $region1: #{tpu_custom_call.1} parent=0
    #allocation3 [shape = 'u8[512]{0}', space=vmem, size = 0x400, scoped, tag = 'output window, operand 0, single buffered']
    #allocation4 [shape = 's32[1]{0}', space=sflag, size = 0x4, scoped, tag = 'scoped memory for tpu_custom_call.1']
    %14 = vsyncpa [#allocation4], 0
    // Predicated region
    $region2: #{tpu_custom_call.1} parent=1 // pred_check
      _
    $region3: #{tpu_custom_call.1} parent=1 // pred_check_branch
      %16 = sbr.rel (0) target = $region5
    $region4: #{tpu_custom_call.1} parent=1 // pred_region
      _
    $region5: #{tpu_custom_call.1} parent=1 // pred_fallthru
      _
    // Predicated region
    $region6: #{tpu_custom_call.1} parent=1 // pred_check
      _
    $region7: #{tpu_custom_call.1} parent=1 // pred_check_branch
      %18 = sbr.rel (0) target = $region9
    $region8: #{tpu_custom_call.1} parent=1 // pred_region
      _
    $region9: #{tpu_custom_call.1} parent=1 // pred_fallthru
      _
    // Predicated region
    $region10: #{tpu_custom_call.1} parent=1 // pred_check
      _
    $region11: #{tpu_custom_call.1} parent=1 // pred_check_branch
      %20 = sbr.rel (0) target = $region13
    $region12: #{tpu_custom_call.1} parent=1 // pred_region
      _
    $region13: #{tpu_custom_call.1} parent=1 // pred_fallthru
      _
    // Predicated region
    $region14: #{tpu_custom_call.1} parent=1 // pred_check
      _
    $region15: #{tpu_custom_call.1} parent=1 // pred_check_branch
      %22 = sbr.rel (0) target = $region17
    $region16: #{tpu_custom_call.1} parent=1 // pred_region
      _
    $region17: #{tpu_custom_call.1} parent=1 // pred_fallthru
      _
    // Predicated region
    $region18: #{tpu_custom_call.1} parent=1 // pred_check
      _
    $region19: #{tpu_custom_call.1} parent=1 // pred_check_branch
      %24 = sbr.rel (0) target = $region21
    $region20: #{tpu_custom_call.1} parent=1 // pred_region
      _
    $region21: #{tpu_custom_call.1} parent=1 // pred_fallthru
      _
    // Predicated region
    $region22: #{tpu_custom_call.1} parent=1 // pred_check
      _
    $region23: #{tpu_custom_call.1} parent=1 // pred_check_branch
      %26 = sbr.rel (0) target = $region25
    $region24: #{tpu_custom_call.1} parent=1 // pred_region
      _
    $region25: #{tpu_custom_call.1} parent=1 // pred_fallthru
      _
    // Predicated region
    $region26: #{tpu_custom_call.1} parent=1 // pred_check
      _
    $region27: #{tpu_custom_call.1} parent=1 // pred_check_branch
      %28 = sbr.rel (0) target = $region29
    $region28: #{tpu_custom_call.1} parent=1 // pred_region
      _
    $region29: #{tpu_custom_call.1} parent=1 // pred_fallthru
      _
    %v29 = vld [vmem:[%s0] sm:$0xff]
    %v30 = vld [vmem:[%s0 + $0x8] sm:$0xff]
    %v31 = vld [vmem:[%s0 + $0x10] sm:$0xff]
    %v32 = vld [vmem:[%s0 + $0x18] sm:$0xff]
    %v33 = vld [vmem:[%s0 + $0x20] sm:$0xff]
    %v34 = vld [vmem:[%s0 + $0x28] sm:$0xff]
    %v35 = vld [vmem:[%s0 + $0x30] sm:$0xff]
    %v36 = vld [vmem:[%s0 + $0x38] sm:$0xff]
    %v37 = vld [vmem:[%s0 + $0x40] sm:$0xff]
    %v38 = vld [vmem:[%s0 + $0x48] sm:$0xff]
    %v39 = vld [vmem:[%s0 + $0x50] sm:$0xff]
    %v40 = vld [vmem:[%s0 + $0x58] sm:$0xff]
    %v41 = vld [vmem:[%s0 + $0x60] sm:$0xff]
    %v42 = vld [vmem:[%s0 + $0x68] sm:$0xff]
    %v43 = vld [vmem:[%s0 + $0x70] sm:$0xff]
    %v44 = vld [vmem:[%s0 + $0x78] sm:$0xff]
    %v45 = vld [vmem:[%s1] sm:$0xff]
    %v46 = vld [vmem:[%s1 + $0x8] sm:$0xff]
    %v47 = vld [vmem:[%s1 + $0x10] sm:$0xff]
    %v48 = vld [vmem:[%s1 + $0x18] sm:$0xf]
    %v49 = vld [vmem:[%s2] sm:$0x1]
    %v51 = vlaneseq
    %v52 = vshrl.u32 %v51, 7
    %v53 = vsub.s32 0, %v52
    %v54 = vrot.slane %v49, %v53
    %vm56 = vcmask 228352
    %v58 = vsel %vm56, %v29, 0
    %v61 = vsel %vm56, %v30, 0
    %v64 = vsel %vm56, %v31, 0
    %v67 = vsel %vm56, %v32, 0
    %v70 = vsel %vm56, %v33, 0
    %v73 = vsel %vm56, %v34, 0
    %v76 = vsel %vm56, %v35, 0
    %v79 = vsel %vm56, %v36, 0
    %v82 = vsel %vm56, %v37, 0
    %v85 = vsel %vm56, %v38, 0
    %v88 = vsel %vm56, %v39, 0
    %v91 = vsel %vm56, %v40, 0
    %v94 = vsel %vm56, %v41, 0
    %v97 = vsel %vm56, %v42, 0
    %v100 = vsel %vm56, %v43, 0
    %v103 = vsel %vm56, %v44, 0
    %vm105 = vcmask 1043456
    %v107 = vsel %vm105, %v48, 0
    %109 = vmatprep.subr.mxu0 0.0
    %110 = vmatpush1.msra.mxu0 %v45
    %111 = vmatprep.subr.mxu0 0.0
    %112 = vmatpush1.msra.mxu0 %v46
    %113 = vmatprep.subr.mxu0 0.0
    %114 = vmatpush1.msra.mxu0 %v47
    %115 = vmatprep.subr.mxu0 0.0
    %116 = vmatpush1.msra.mxu0 %v107
    %117 = vmatprep.subr.mxu0 0.0
    %118 = vmatpush1.msra.mxu0 0.0
    %119 = vmatprep.subr.mxu0 0.0
    %120 = vmatpush1.msra.mxu0 0.0
    %121 = vmatprep.subr.mxu0 0.0
    %122 = vmatpush1.msra.mxu0 0.0
    %123 = vmatprep.subr.mxu0 0.0
    %124 = vmatpush1.msra.mxu0 0.0
    %125 = vmatprep.subr.mxu0 0.0
    %126 = vmatpush1.msra.mxu0 0.0
    %127 = vmatprep.subr.mxu0 0.0
    %128 = vmatpush1.msra.mxu0 0.0
    %129 = vmatprep.subr.mxu0 0.0
    %130 = vmatpush1.msra.mxu0 0.0
    %131 = vmatprep.subr.mxu0 0.0
    %132 = vmatpush1.msra.mxu0 0.0
    %133 = vmatprep.subr.mxu0 0.0
    %134 = vmatpush1.msra.mxu0 0.0
    %135 = vmatprep.subr.mxu0 0.0
    %136 = vmatpush1.msra.mxu0 0.0
    %137 = vmatprep.subr.mxu0 0.0
    %138 = vmatpush1.msra.mxu0 0.0
    %139 = vmatprep.subr.mxu0 0.0
    %140 = vmatpush1.msra.mxu0 0.0
    %141 = vmatprep.subr.mxu0 0.0
    %142 = vmatpush1.msra.mxu0 0.0
    %143 = vmatprep.subr.mxu0 0.0
    %144 = vmatpush1.msra.mxu0 0.0
    %145 = vmatprep.subr.mxu0 0.0
    %146 = vmatpush1.msra.mxu0 0.0
    %147 = vmatprep.subr.mxu0 0.0
    %148 = vmatpush1.msra.mxu0 0.0
    %149 = vmatprep.subr.mxu0 0.0
    %150 = vmatpush1.msra.mxu0 0.0
    %151 = vmatprep.subr.mxu0 0.0
    %152 = vmatpush1.msra.mxu0 0.0
    %153 = vmatprep.subr.mxu0 0.0
    %154 = vmatpush1.msra.mxu0 0.0
    %155 = vmatprep.subr.mxu0 0.0
    %156 = vmatpush1.msra.mxu0 0.0
    %157 = vmatprep.subr.mxu0 0.0
    %158 = vmatpush1.msra.mxu0 0.0
    %159 = vmatprep.subr.mxu0 0.0
    %160 = vmatpush1.msra.mxu0 0.0
    %161 = vmatprep.subr.mxu0 0.0
    %162 = vmatpush1.msra.mxu0 0.0
    %163 = vmatprep.subr.mxu0 0.0
    %164 = vmatpush1.msra.mxu0 0.0
    %165 = vmatprep.subr.mxu0 0.0
    %166 = vmatpush1.msra.mxu0 0.0
    %167 = vmatprep.subr.mxu0 0.0
    %168 = vmatpush1.msra.mxu0 0.0
    %169 = vmatprep.subr.mxu0 0.0
    %170 = vmatpush1.msra.mxu0 0.0
    %171 = vmatprep.subr.mxu0 0.0
    %172 = vmatpush1.msra.mxu0 0.0
    %173 = vmatprep.mubr.f32.mxu0 0.0
    %174 = vmatmul.mubr.f32.gmra.mrb[0].mxu0 %v58
    %v175 = vpop.f32.mrb[0].mxu0
    %v176 = vadd.f32 %v54, %v175
    %v177 = vpop.f32.mrb[0].mxu0
    %178 = vmatprep.mubr.f32.mxu0 0.0
    %179 = vmatmul.mubr.f32.gmra.mrb[0].mxu0 %v61
    %v180 = vpop.f32.mrb[0].mxu0
    %v181 = vadd.f32 %v54, %v180
    %v182 = vpop.f32.mrb[0].mxu0
    %183 = vmatprep.mubr.f32.mxu0 0.0
    %184 = vmatmul.mubr.f32.gmra.mrb[0].mxu0 %v64
    %v185 = vpop.f32.mrb[0].mxu0
    %v186 = vadd.f32 %v54, %v185
    %v187 = vpop.f32.mrb[0].mxu0
    %188 = vmatprep.mubr.f32.mxu0 0.0
    %189 = vmatmul.mubr.f32.gmra.mrb[0].mxu0 %v67
    %v190 = vpop.f32.mrb[0].mxu0
    %v191 = vadd.f32 %v54, %v190
    %v192 = vpop.f32.mrb[0].mxu0
    %193 = vmatprep.mubr.f32.mxu0 0.0
    %194 = vmatmul.mubr.f32.gmra.mrb[0].mxu0 %v70
    %v195 = vpop.f32.mrb[0].mxu0
    %v196 = vadd.f32 %v54, %v195
    %v197 = vpop.f32.mrb[0].mxu0
    %198 = vmatprep.mubr.f32.mxu0 0.0
    %199 = vmatmul.mubr.f32.gmra.mrb[0].mxu0 %v73
    %v200 = vpop.f32.mrb[0].mxu0
    %v201 = vadd.f32 %v54, %v200
    %v202 = vpop.f32.mrb[0].mxu0
    %203 = vmatprep.mubr.f32.mxu0 0.0
    %204 = vmatmul.mubr.f32.gmra.mrb[0].mxu0 %v76
    %v205 = vpop.f32.mrb[0].mxu0
    %v206 = vadd.f32 %v54, %v205
    %v207 = vpop.f32.mrb[0].mxu0
    %208 = vmatprep.mubr.f32.mxu0 0.0
    %209 = vmatmul.mubr.f32.gmra.mrb[0].mxu0 %v79
    %v210 = vpop.f32.mrb[0].mxu0
    %v211 = vadd.f32 %v54, %v210
    %v212 = vpop.f32.mrb[0].mxu0
    %213 = vmatprep.mubr.f32.mxu0 0.0
    %214 = vmatmul.mubr.f32.gmra.mrb[0].mxu0 %v82
    %v215 = vpop.f32.mrb[0].mxu0
    %v216 = vadd.f32 %v54, %v215
    %v217 = vpop.f32.mrb[0].mxu0
    %218 = vmatprep.mubr.f32.mxu0 0.0
    %219 = vmatmul.mubr.f32.gmra.mrb[0].mxu0 %v85
    %v220 = vpop.f32.mrb[0].mxu0
    %v221 = vadd.f32 %v54, %v220
    %v222 = vpop.f32.mrb[0].mxu0
    %223 = vmatprep.mubr.f32.mxu0 0.0
    %224 = vmatmul.mubr.f32.gmra.mrb[0].mxu0 %v88
    %v225 = vpop.f32.mrb[0].mxu0
    %v226 = vadd.f32 %v54, %v225
    %v227 = vpop.f32.mrb[0].mxu0
    %228 = vmatprep.mubr.f32.mxu0 0.0
    %229 = vmatmul.mubr.f32.gmra.mrb[0].mxu0 %v91
    %v230 = vpop.f32.mrb[0].mxu0
    %v231 = vadd.f32 %v54, %v230
    %v232 = vpop.f32.mrb[0].mxu0
    %233 = vmatprep.mubr.f32.mxu0 0.0
    %234 = vmatmul.mubr.f32.gmra.mrb[0].mxu0 %v94
    %v235 = vpop.f32.mrb[0].mxu0
    %v236 = vadd.f32 %v54, %v235
    %v237 = vpop.f32.mrb[0].mxu0
    %238 = vmatprep.mubr.f32.mxu0 0.0
    %239 = vmatmul.mubr.f32.gmra.mrb[0].mxu0 %v97
    %v240 = vpop.f32.mrb[0].mxu0
    %v241 = vadd.f32 %v54, %v240
    %v242 = vpop.f32.mrb[0].mxu0
    %243 = vmatprep.mubr.f32.mxu0 0.0
    %244 = vmatmul.mubr.f32.gmra.mrb[0].mxu0 %v100
    %v245 = vpop.f32.mrb[0].mxu0
    %v246 = vadd.f32 %v54, %v245
    %v247 = vpop.f32.mrb[0].mxu0
    %248 = vmatprep.mubr.f32.mxu0 0.0
    %249 = vmatmul.mubr.f32.gmra.mrb[0].mxu0 %v103
    %v250 = vpop.f32.mrb[0].mxu0
    %v251 = vadd.f32 %v54, %v250
    %v252 = vpop.f32.mrb[0].mxu0
    %253 = vdwg.mxu0
    %v254 = vmax.f32 %v176, 0.0
    %v255 = vmax.f32 %v181, 0.0
    %v256 = vmax.f32 %v186, 0.0
    %v257 = vmax.f32 %v191, 0.0
    %v258 = vmax.f32 %v196, 0.0
    %v259 = vmax.f32 %v201, 0.0
    %v260 = vmax.f32 %v206, 0.0
    %v261 = vmax.f32 %v211, 0.0
    %v262 = vmax.f32 %v216, 0.0
    %v263 = vmax.f32 %v221, 0.0
    %v264 = vmax.f32 %v226, 0.0
    %v265 = vmax.f32 %v231, 0.0
    %v266 = vmax.f32 %v236, 0.0
    %v267 = vmax.f32 %v241, 0.0
    %v268 = vmax.f32 %v246, 0.0
    %v269 = vmax.f32 %v251, 0.0
    %v270 = vld [vmem:[%s3] sm:$0xff]
    %v271 = vld [vmem:[%s3 + $0x8] sm:$0xff]
    %v272 = vld [vmem:[%s3 + $0x10] sm:$0xff]
    %v273 = vld [vmem:[%s3 + $0x18] sm:$0xff]
    %v274 = vld [vmem:[%s3 + $0x20] sm:$0xff]
    %v275 = vld [vmem:[%s3 + $0x28] sm:$0xff]
    %v276 = vld [vmem:[%s3 + $0x30] sm:$0xff]
    %v277 = vld [vmem:[%s3 + $0x38] sm:$0xff]
    %v278 = vld [vmem:[%s4] sm:$0x1]
    %v280 = vlaneseq
    %v281 = vshrl.u32 %v280, 7
    %v282 = vsub.s32 0, %v281
    %v283 = vrot.slane %v278, %v282
    %vm285 = vcmask 523264
    %v287 = vsel %vm285, %v254, 0
    %v290 = vsel %vm285, %v255, 0
    %v293 = vsel %vm285, %v256, 0
    %v296 = vsel %vm285, %v257, 0
    %v299 = vsel %vm285, %v258, 0
    %v302 = vsel %vm285, %v259, 0
    %v305 = vsel %vm285, %v260, 0
    %v308 = vsel %vm285, %v261, 0
    %v311 = vsel %vm285, %v262, 0
    %v314 = vsel %vm285, %v263, 0
    %v317 = vsel %vm285, %v264, 0
    %v320 = vsel %vm285, %v265, 0
    %v323 = vsel %vm285, %v266, 0
    %v326 = vsel %vm285, %v267, 0
    %v329 = vsel %vm285, %v268, 0
    %v332 = vsel %vm285, %v269, 0
    %334 = vmatprep.subr.mxu0 0.0
    %335 = vmatpush1.msra.mxu0 %v270
    %336 = vmatprep.subr.mxu0 0.0
    %337 = vmatpush1.msra.mxu0 %v271
    %338 = vmatprep.subr.mxu0 0.0
    %339 = vmatpush1.msra.mxu0 %v272
    %340 = vmatprep.subr.mxu0 0.0
    %341 = vmatpush1.msra.mxu0 %v273
    %342 = vmatprep.subr.mxu0 0.0
    %343 = vmatpush1.msra.mxu0 %v274
    %344 = vmatprep.subr.mxu0 0.0
    %345 = vmatpush1.msra.mxu0 %v275
    %346 = vmatprep.subr.mxu0 0.0
    %347 = vmatpush1.msra.mxu0 %v276
    %348 = vmatprep.subr.mxu0 0.0
    %349 = vmatpush1.msra.mxu0 %v277
    %350 = vmatprep.subr.mxu0 0.0
    %351 = vmatpush1.msra.mxu0 0.0
    %352 = vmatprep.subr.mxu0 0.0
    %353 = vmatpush1.msra.mxu0 0.0
    %354 = vmatprep.subr.mxu0 0.0
    %355 = vmatpush1.msra.mxu0 0.0
    %356 = vmatprep.subr.mxu0 0.0
    %357 = vmatpush1.msra.mxu0 0.0
    %358 = vmatprep.subr.mxu0 0.0
    %359 = vmatpush1.msra.mxu0 0.0
    %360 = vmatprep.subr.mxu0 0.0
    %361 = vmatpush1.msra.mxu0 0.0
    %362 = vmatprep.subr.mxu0 0.0
    %363 = vmatpush1.msra.mxu0 0.0
    %364 = vmatprep.subr.mxu0 0.0
    %365 = vmatpush1.msra.mxu0 0.0
    %366 = vmatprep.subr.mxu0 0.0
    %367 = vmatpush1.msra.mxu0 0.0
    %368 = vmatprep.subr.mxu0 0.0
    %369 = vmatpush1.msra.mxu0 0.0
    %370 = vmatprep.subr.mxu0 0.0
    %371 = vmatpush1.msra.mxu0 0.0
    %372 = vmatprep.subr.mxu0 0.0
    %373 = vmatpush1.msra.mxu0 0.0
    %374 = vmatprep.subr.mxu0 0.0
    %375 = vmatpush1.msra.mxu0 0.0
    %376 = vmatprep.subr.mxu0 0.0
    %377 = vmatpush1.msra.mxu0 0.0
    %378 = vmatprep.subr.mxu0 0.0
    %379 = vmatpush1.msra.mxu0 0.0
    %380 = vmatprep.subr.mxu0 0.0
    %381 = vmatpush1.msra.mxu0 0.0
    %382 = vmatprep.subr.mxu0 0.0
    %383 = vmatpush1.msra.mxu0 0.0
    %384 = vmatprep.subr.mxu0 0.0
    %385 = vmatpush1.msra.mxu0 0.0
    %386 = vmatprep.subr.mxu0 0.0
    %387 = vmatpush1.msra.mxu0 0.0
    %388 = vmatprep.subr.mxu0 0.0
    %389 = vmatpush1.msra.mxu0 0.0
    %390 = vmatprep.subr.mxu0 0.0
    %391 = vmatpush1.msra.mxu0 0.0
    %392 = vmatprep.subr.mxu0 0.0
    %393 = vmatpush1.msra.mxu0 0.0
    %394 = vmatprep.subr.mxu0 0.0
    %395 = vmatpush1.msra.mxu0 0.0
    %396 = vmatprep.subr.mxu0 0.0
    %397 = vmatpush1.msra.mxu0 0.0
    %398 = vmatprep.mubr.f32.mxu0 0.0
    %399 = vmatmul.mubr.f32.gmra.mrb[0].mxu0 %v287
    %v400 = vpop.f32.mrb[0].mxu0
    %v401 = vadd.f32 %v283, %v400
    %v402 = vpop.f32.mrb[0].mxu0
    %403 = vmatprep.mubr.f32.mxu0 0.0
    %404 = vmatmul.mubr.f32.gmra.mrb[0].mxu0 %v290
    %v405 = vpop.f32.mrb[0].mxu0
    %v406 = vadd.f32 %v283, %v405
    %v407 = vpop.f32.mrb[0].mxu0
    %408 = vmatprep.mubr.f32.mxu0 0.0
    %409 = vmatmul.mubr.f32.gmra.mrb[0].mxu0 %v293
    %v410 = vpop.f32.mrb[0].mxu0
    %v411 = vadd.f32 %v283, %v410
    %v412 = vpop.f32.mrb[0].mxu0
    %413 = vmatprep.mubr.f32.mxu0 0.0
    %414 = vmatmul.mubr.f32.gmra.mrb[0].mxu0 %v296
    %v415 = vpop.f32.mrb[0].mxu0
    %v416 = vadd.f32 %v283, %v415
    %v417 = vpop.f32.mrb[0].mxu0
    %418 = vmatprep.mubr.f32.mxu0 0.0
    %419 = vmatmul.mubr.f32.gmra.mrb[0].mxu0 %v299
    %v420 = vpop.f32.mrb[0].mxu0
    %v421 = vadd.f32 %v283, %v420
    %v422 = vpop.f32.mrb[0].mxu0
    %423 = vmatprep.mubr.f32.mxu0 0.0
    %424 = vmatmul.mubr.f32.gmra.mrb[0].mxu0 %v302
    %v425 = vpop.f32.mrb[0].mxu0
    %v426 = vadd.f32 %v283, %v425
    %v427 = vpop.f32.mrb[0].mxu0
    %428 = vmatprep.mubr.f32.mxu0 0.0
    %429 = vmatmul.mubr.f32.gmra.mrb[0].mxu0 %v305
    %v430 = vpop.f32.mrb[0].mxu0
    %v431 = vadd.f32 %v283, %v430
    %v432 = vpop.f32.mrb[0].mxu0
    %433 = vmatprep.mubr.f32.mxu0 0.0
    %434 = vmatmul.mubr.f32.gmra.mrb[0].mxu0 %v308
    %v435 = vpop.f32.mrb[0].mxu0
    %v436 = vadd.f32 %v283, %v435
    %v437 = vpop.f32.mrb[0].mxu0
    %438 = vmatprep.mubr.f32.mxu0 0.0
    %439 = vmatmul.mubr.f32.gmra.mrb[0].mxu0 %v311
    %v440 = vpop.f32.mrb[0].mxu0
    %v441 = vadd.f32 %v283, %v440
    %v442 = vpop.f32.mrb[0].mxu0
    %443 = vmatprep.mubr.f32.mxu0 0.0
    %444 = vmatmul.mubr.f32.gmra.mrb[0].mxu0 %v314
    %v445 = vpop.f32.mrb[0].mxu0
    %v446 = vadd.f32 %v283, %v445
    %v447 = vpop.f32.mrb[0].mxu0
    %448 = vmatprep.mubr.f32.mxu0 0.0
    %449 = vmatmul.mubr.f32.gmra.mrb[0].mxu0 %v317
    %v450 = vpop.f32.mrb[0].mxu0
    %v451 = vadd.f32 %v283, %v450
    %v452 = vpop.f32.mrb[0].mxu0
    %453 = vmatprep.mubr.f32.mxu0 0.0
    %454 = vmatmul.mubr.f32.gmra.mrb[0].mxu0 %v320
    %v455 = vpop.f32.mrb[0].mxu0
    %v456 = vadd.f32 %v283, %v455
    %v457 = vpop.f32.mrb[0].mxu0
    %458 = vmatprep.mubr.f32.mxu0 0.0
    %459 = vmatmul.mubr.f32.gmra.mrb[0].mxu0 %v323
    %v460 = vpop.f32.mrb[0].mxu0
    %v461 = vadd.f32 %v283, %v460
    %v462 = vpop.f32.mrb[0].mxu0
    %463 = vmatprep.mubr.f32.mxu0 0.0
    %464 = vmatmul.mubr.f32.gmra.mrb[0].mxu0 %v326
    %v465 = vpop.f32.mrb[0].mxu0
    %v466 = vadd.f32 %v283, %v465
    %v467 = vpop.f32.mrb[0].mxu0
    %468 = vmatprep.mubr.f32.mxu0 0.0
    %469 = vmatmul.mubr.f32.gmra.mrb[0].mxu0 %v329
    %v470 = vpop.f32.mrb[0].mxu0
    %v471 = vadd.f32 %v283, %v470
    %v472 = vpop.f32.mrb[0].mxu0
    %473 = vmatprep.mubr.f32.mxu0 0.0
    %474 = vmatmul.mubr.f32.gmra.mrb[0].mxu0 %v332
    %v475 = vpop.f32.mrb[0].mxu0
    %v476 = vadd.f32 %v283, %v475
    %v477 = vpop.f32.mrb[0].mxu0
    %478 = vdwg.mxu0
    %v479 = vmax.f32 %v401, 0.0
    %v480 = vmax.f32 %v406, 0.0
    %v481 = vmax.f32 %v411, 0.0
    %v482 = vmax.f32 %v416, 0.0
    %v483 = vmax.f32 %v421, 0.0
    %v484 = vmax.f32 %v426, 0.0
    %v485 = vmax.f32 %v431, 0.0
    %v486 = vmax.f32 %v436, 0.0
    %v487 = vmax.f32 %v441, 0.0
    %v488 = vmax.f32 %v446, 0.0
    %v489 = vmax.f32 %v451, 0.0
    %v490 = vmax.f32 %v456, 0.0
    %v491 = vmax.f32 %v461, 0.0
    %v492 = vmax.f32 %v466, 0.0
    %v493 = vmax.f32 %v471, 0.0
    %v494 = vmax.f32 %v476, 0.0
    %v495 = vld [vmem:[%s5] sm:$0x1]
    %v496 = vld [vmem:[#allocation2] sm:$0x1]
    %498 = vset.pattern.permute.xlu0 0
    %499 = vperm.xlu0 %498, %v496
    %v500 = vpop.permute.xlu0 %499
    %v502 = vlaneseq
    %v503 = vshrl.u32 %v502, 7
    %v504 = vsub.s32 0, %v503
    %v505 = vrot.slane %v500, %v504
    %vm506 = vcmask 261120
    %v508 = vsel %vm506, %v495, 0
    %v511 = vsel %vm506, %v479, 0
    %v514 = vsel %vm506, %v480, 0
    %v517 = vsel %vm506, %v481, 0
    %v520 = vsel %vm506, %v482, 0
    %v523 = vsel %vm506, %v483, 0
    %v526 = vsel %vm506, %v484, 0
    %v529 = vsel %vm506, %v485, 0
    %v532 = vsel %vm506, %v486, 0
    %v535 = vsel %vm506, %v487, 0
    %v538 = vsel %vm506, %v488, 0
    %v541 = vsel %vm506, %v489, 0
    %v544 = vsel %vm506, %v490, 0
    %v547 = vsel %vm506, %v491, 0
    %v550 = vsel %vm506, %v492, 0
    %v553 = vsel %vm506, %v493, 0
    %v556 = vsel %vm506, %v494, 0
    %558 = vmatprep.subr.mxu0 0.0
    %559 = vmatpush1.xpose.msra.mxu0 %v511
    %560 = vmatprep.subr.mxu0 0.0
    %561 = vmatpush1.xpose.msra.mxu0 %v514
    %562 = vmatprep.subr.mxu0 0.0
    %563 = vmatpush1.xpose.msra.mxu0 %v517
    %564 = vmatprep.subr.mxu0 0.0
    %565 = vmatpush1.xpose.msra.mxu0 %v520
    %566 = vmatprep.subr.mxu0 0.0
    %567 = vmatpush1.xpose.msra.mxu0 %v523
    %568 = vmatprep.subr.mxu0 0.0
    %569 = vmatpush1.xpose.msra.mxu0 %v526
    %570 = vmatprep.subr.mxu0 0.0
    %571 = vmatpush1.xpose.msra.mxu0 %v529
    %572 = vmatprep.subr.mxu0 0.0
    %573 = vmatpush1.xpose.msra.mxu0 %v532
    %574 = vmatprep.subr.mxu0 0.0
    %575 = vmatpush1.xpose.msra.mxu0 %v535
    %576 = vmatprep.subr.mxu0 0.0
    %577 = vmatpush1.xpose.msra.mxu0 %v538
    %578 = vmatprep.subr.mxu0 0.0
    %579 = vmatpush1.xpose.msra.mxu0 %v541
    %580 = vmatprep.subr.mxu0 0.0
    %581 = vmatpush1.xpose.msra.mxu0 %v544
    %582 = vmatprep.subr.mxu0 0.0
    %583 = vmatpush1.xpose.msra.mxu0 %v547
    %584 = vmatprep.subr.mxu0 0.0
    %585 = vmatpush1.xpose.msra.mxu0 %v550
    %586 = vmatprep.subr.mxu0 0.0
    %587 = vmatpush1.xpose.msra.mxu0 %v553
    %588 = vmatprep.subr.mxu0 0.0
    %589 = vmatpush1.xpose.msra.mxu0 %v556
    %590 = vmatprep.subr.mxu0 0.0
    %591 = vmatpush1.xpose.msra.mxu0 0.0
    %592 = vmatprep.subr.mxu0 0.0
    %593 = vmatpush1.xpose.msra.mxu0 0.0
    %594 = vmatprep.subr.mxu0 0.0
    %595 = vmatpush1.xpose.msra.mxu0 0.0
    %596 = vmatprep.subr.mxu0 0.0
    %597 = vmatpush1.xpose.msra.mxu0 0.0
    %598 = vmatprep.subr.mxu0 0.0
    %599 = vmatpush1.xpose.msra.mxu0 0.0
    %600 = vmatprep.subr.mxu0 0.0
    %601 = vmatpush1.xpose.msra.mxu0 0.0
    %602 = vmatprep.subr.mxu0 0.0
    %603 = vmatpush1.xpose.msra.mxu0 0.0
    %604 = vmatprep.subr.mxu0 0.0
    %605 = vmatpush1.xpose.msra.mxu0 0.0
    %606 = vmatprep.subr.mxu0 0.0
    %607 = vmatpush1.xpose.msra.mxu0 0.0
    %608 = vmatprep.subr.mxu0 0.0
    %609 = vmatpush1.xpose.msra.mxu0 0.0
    %610 = vmatprep.subr.mxu0 0.0
    %611 = vmatpush1.xpose.msra.mxu0 0.0
    %612 = vmatprep.subr.mxu0 0.0
    %613 = vmatpush1.xpose.msra.mxu0 0.0
    %614 = vmatprep.subr.mxu0 0.0
    %615 = vmatpush1.xpose.msra.mxu0 0.0
    %616 = vmatprep.subr.mxu0 0.0
    %617 = vmatpush1.xpose.msra.mxu0 0.0
    %618 = vmatprep.subr.mxu0 0.0
    %619 = vmatpush1.xpose.msra.mxu0 0.0
    %620 = vmatprep.subr.mxu0 0.0
    %621 = vmatpush1.xpose.msra.mxu0 0.0
    %622 = vmatprep.mubr.f32.mxu0 0.0
    %623 = vmatmul.mubr.f32.gmra.mrb[0].mxu0 %v508
    %v624 = vpop.f32.mrb[0].mxu0
    %v625 = vadd.f32 %v505, %v624
    %v626 = vpop.f32.mrb[0].mxu0
    %627 = vdwg.mxu0
    %628 = vst [vmem:[#allocation3] sm:$0x1] %v625
    // Predicated region
    $region30: #{tpu_custom_call.1} parent=1 // pred_check
      _
    $region31: #{tpu_custom_call.1} parent=1 // pred_check_branch
      %630 = sbr.rel (0) target = $region33
    $region32: #{tpu_custom_call.1} parent=1 // pred_region
      %s632 = ssub.s32 16, 16
      %633 = vsyncadd [#allocation4], %s632
      %s635 = sshll.u32 [#allocation3], 4
      %s636 = int_to_ptr.vmem [resolvable:$true] %s635
      %638 = dma.vmem_to_hbm [thread:$0]  %s636, 16, %s7, [#allocation4]
    $region33: #{tpu_custom_call.1} parent=1 // pred_fallthru
      _
    // Predicated region
    $region34: #{tpu_custom_call.1} parent=1 // pred_check
      _
    $region35: #{tpu_custom_call.1} parent=1 // pred_check_branch
      %640 = sbr.rel (0) target = $region37
    $region36: #{tpu_custom_call.1} parent=1 // pred_region
      %641 = dma.done [#allocation4], 16
    $region37: #{tpu_custom_call.1} parent=1 // pred_fallthru
      _
    %642 = vsyncpa [#allocation4], 1

</llo_original>
